<compile_context>
chip_gen: v5e
topology: v5e:2x2
jax: 0.10.0
libtpu: 0.0.40
codegen_flags: <defaults>
</compile_context>

<pallas_src>
import functools
import math

import jax
import jax.numpy as jnp
from jax.experimental import pallas as pl
from jax.experimental.pallas import tpu as pltpu

NUM_HEADS = 8  # nn.MultiheadAttention(num_heads=8)


def _layernorm(x, gamma, beta, eps=1e-5):
    mu = jnp.mean(x, axis=-1, keepdims=True)
    var = jnp.mean(jnp.square(x - mu), axis=-1, keepdims=True)
    return (x - mu) * jax.lax.rsqrt(var + eps) * gamma + beta


def visquery_kernel(eeg_ref, table_ref,
                    base_w_ref, base_b_ref,
                    te_w_ref, te_b_ref, te_g_ref, te_beta_ref,
                    wq_ref, bq_ref, wkv_ref, bkv_ref,
                    wo_ref, bo_ref,
                    pool_ref, expand_ref,
                    h1a_w_ref, h1b_w_ref, h1_b_ref,
                    kw_g_ref, kw_beta_ref, col_g_ref, col_beta_ref,
                    kw2_w_ref, kw2_b_ref, col2_w_ref, col2_b_ref,
                    kw_out_ref, col_out_ref):
    f32 = jnp.float32
    bf16 = jnp.bfloat16

    twoB = eeg_ref.shape[0]
    B = twoB // 2
    BNC = table_ref.shape[0]
    NC = BNC // B
    H = base_w_ref.shape[1]
    NH = pool_ref.shape[1]

    def mm(x_bf16, w_ref, b_ref=None):
        y = jnp.dot(x_bf16, w_ref[...], preferred_element_type=f32)
        if b_ref is not None:
            y = y + b_ref[...]
        return y

    # --- EEG backbone on cat([table_eeg, query_eeg], dim=0) ---
    # TODO(synk): labram_base_patch200_200 is an external pretrained EEG
    # backbone; substituted here by a deterministic linear projection of the
    # flattened EEG signal -> hidden_dim.
    feats = mm(eeg_ref[...], base_w_ref, base_b_ref)          # [2B, H] f32
    table_feat = feats[:B, :]                                 # [B, H]
    query_feat = feats[B:, :]                                 # [B, H]

    # table_encoder: Linear -> LayerNorm -> ReLU -> Dropout(identity), batched
    te = mm(table_ref[...], te_w_ref, te_b_ref)               # [B*NC, H]
    te = jnp.maximum(_layernorm(te, te_g_ref[...], te_beta_ref[...]), 0.0)
    te_bf = te.astype(bf16)

    # cross-attention projections (1/sqrt(head_dim) pre-baked into Wq/bq;
    # K|V fused into a single [H, 2H] matmul)
    q = mm(table_feat.astype(bf16), wq_ref, bq_ref)           # [B, H]
    kv = mm(te_bf, wkv_ref, bkv_ref)                          # [B*NC, 2H]
    k = kv[:, :H]                                             # [B*NC, H]
    v = kv[:, H:]                                             # [B*NC, H]

    # per-head scores: s[b, nc, h] = sum_{d in head h} q[b, d] * k[b*NC+nc, d]
    prod = (q[:, None, :] * k.reshape(B, NC, H)).reshape(BNC, H)          # f32
    s = jnp.dot(prod.astype(bf16), pool_ref[...],
                preferred_element_type=f32)                   # [B*NC, NH]
    s3 = s.reshape(B, NC, NH)
    s3 = s3 - jnp.max(s3, axis=1, keepdims=True)              # softmax over NC
    p3 = jnp.exp(s3)
    denom = jnp.sum(p3, axis=1, keepdims=True)                # [B, 1, NH]
    p3 = p3 * pl.reciprocal(denom, approx=True)

    # expand head probabilities back to the H lanes and take the weighted sum
    p_exp = jnp.dot(p3.reshape(BNC, NH).astype(bf16), expand_ref[...],
                    preferred_element_type=f32)               # [B*NC, H]
    attn = jnp.sum((p_exp * v).reshape(B, NC, H), axis=1)     # [B, H]
    attn_out = mm(attn.astype(bf16), wo_ref, bo_ref)          # out_proj, [B, H]

    # fused first layer of keyword/column heads on
    # combined = cat([attended_table, query_eeg_feat], dim=-1)
    h1 = (jnp.dot(attn_out.astype(bf16), h1a_w_ref[...], preferred_element_type=f32)
          + jnp.dot(query_feat.astype(bf16), h1b_w_ref[...], preferred_element_type=f32)
          + h1_b_ref[...])                                    # [B, 2H]
    kw_h = jnp.maximum(_layernorm(h1[:, :H], kw_g_ref[...], kw_beta_ref[...]), 0.0)
    col_h = jnp.maximum(_layernorm(h1[:, H:], col_g_ref[...], col_beta_ref[...]), 0.0)

    # final projections (lane-padded to a multiple of 128 -> unmasked stores)
    kw_out_ref[...] = mm(kw_h.astype(bf16), kw2_w_ref, kw2_b_ref)
    col_out_ref[...] = mm(col_h.astype(bf16), col2_w_ref, col2_b_ref)


def init_params(key, *, channels, time_points, hidden_dim,
                num_sql_keywords, max_table_columns):
    ct = channels * time_points
    H = hidden_dim
    keys = jax.random.split(key, 16)
    n = lambda k, shape: (0.05 * jax.random.normal(k, shape)).astype(jnp.float32)
    zeros = lambda d: jnp.zeros((1, d), jnp.float32)
    ones = lambda d: jnp.ones((1, d), jnp.float32)
    return {
        "base_w": n(keys[0], (ct, H)), "base_b": zeros(H),
        "te_w": n(keys[1], (H, H)), "te_b": zeros(H),
        "te_g": ones(H), "te_beta": zeros(H),
        "wq": n(keys[2], (H, H)), "bq": zeros(H),
        "wk": n(keys[3], (H, H)), "bk": zeros(H),
        "wv": n(keys[4], (H, H)), "bv": zeros(H),
        "wo": n(keys[5], (H, H)), "bo": zeros(H),
        "kw1_w": n(keys[6], (2 * H, H)), "kw1_b": zeros(H),
        "kw_g": ones(H), "kw_beta": zeros(H),
        "kw2_w": n(keys[7], (H, num_sql_keywords)), "kw2_b": zeros(num_sql_keywords),
        "col1_w": n(keys[8], (2 * H, H)), "col1_b": zeros(H),
        "col_g": ones(H), "col_beta": zeros(H),
        "col2_w": n(keys[9], (H, max_table_columns)), "col2_b": zeros(max_table_columns),
    }


def prepare_params(params, *, hidden_dim, num_sql_keywords, max_table_columns):
    """One-time weight fusion / casting / padding into kernel-ready arrays."""
    H = hidden_dim
    NH = NUM_HEADS
    HD = H // NH
    bf16 = jnp.bfloat16
    scale = 1.0 / math.sqrt(HD)

    # 0/1 head pooling / expansion matrices (sum over head lanes on the MXU)
    pool = (jnp.arange(H)[:, None] // HD == jnp.arange(NH)[None, :]).astype(bf16)  # [H, NH]
    expand = pool.T                                                                 # [NH, H]

    # fused K|V projection and fused first layers of the two heads
    wkv = jnp.concatenate([params["wk"], params["wv"]], axis=1).astype(bf16)        # [H, 2H]
    bkv = jnp.concatenate([params["bk"], params["bv"]], axis=1)                     # [1, 2H]
    h1a = jnp.concatenate([params["kw1_w"][:H], params["col1_w"][:H]], axis=1).astype(bf16)  # [H, 2H]
    h1b = jnp.concatenate([params["kw1_w"][H:], params["col1_w"][H:]], axis=1).astype(bf16)  # [H, 2H]
    h1_b = jnp.concatenate([params["kw1_b"], params["col1_b"]], axis=1)             # [1, 2H]

    # pad final-head outputs to a multiple of 128 lanes (unmasked vst)
    def pad_lanes(w, b, n):
        npad = (-n) % 128
        if npad:
            w = jnp.pad(w, ((0, 0), (0, npad)))
            b = jnp.pad(b, ((0, 0), (0, npad)))
        return w.astype(bf16), b

    kw2_w, kw2_b = pad_lanes(params["kw2_w"], params["kw2_b"], num_sql_keywords)
    col2_w, col2_b = pad_lanes(params["col2_w"], params["col2_b"], max_table_columns)

    return {
        "base_w": params["base_w"].astype(bf16), "base_b": params["base_b"],
        "te_w": params["te_w"].astype(bf16), "te_b": params["te_b"],
        "te_g": params["te_g"], "te_beta": params["te_beta"],
        # attention scale 1/sqrt(head_dim) baked into the Q projection
        "wq": (params["wq"] * scale).astype(bf16), "bq": params["bq"] * scale,
        "wkv": wkv, "bkv": bkv,
        "wo": params["wo"].astype(bf16), "bo": params["bo"],
        "pool": pool, "expand": expand,
        "h1a": h1a, "h1b": h1b, "h1_b": h1_b,
        "kw_g": params["kw_g"], "kw_beta": params["kw_beta"],
        "col_g": params["col_g"], "col_beta": params["col_beta"],
        "kw2_w": kw2_w, "kw2_b": kw2_b,
        "col2_w": col2_w, "col2_b": col2_b,
    }


def vis_query_forward(table_eeg, query_eeg, table_content, prep,
                      num_sql_keywords, max_table_columns):
    B, C, T = table_eeg.shape
    _, NC, H = table_content.shape
    NH = NUM_HEADS
    bf16 = jnp.bfloat16

    # inputs: batch-concat + flatten; matmul operands in bf16
    eeg = jnp.concatenate([table_eeg, query_eeg], axis=0)
    eeg = eeg.reshape(2 * B, C * T).astype(bf16)
    table_flat = table_content.reshape(B * NC, H).astype(bf16)

    NKp = prep["kw2_w"].shape[1]
    NCp = prep["col2_w"].shape[1]

    args = [
        eeg, table_flat,
        prep["base_w"], prep["base_b"],
        prep["te_w"], prep["te_b"], prep["te_g"], prep["te_beta"],
        prep["wq"], prep["bq"], prep["wkv"], prep["bkv"],
        prep["wo"], prep["bo"],
        prep["pool"], prep["expand"],
        prep["h1a"], prep["h1b"], prep["h1_b"],
        prep["kw_g"], prep["kw_beta"], prep["col_g"], prep["col_beta"],
        prep["kw2_w"], prep["kw2_b"], prep["col2_w"], prep["col2_b"],
    ]

    # advisory cost estimate for the XLA scheduler
    CT = C * T
    flops = 2 * (2 * B * CT * H
                 + (B * NC) * H * H            # table encoder
                 + B * H * H                   # Q projection
                 + (B * NC) * H * 2 * H        # fused K|V
                 + 2 * (B * NC) * H * NH       # head pool + expand
                 + B * H * H                   # out_proj
                 + 2 * B * H * 2 * H           # fused head layer 1
                 + B * H * (NKp + NCp))        # final projections
    transcendentals = B * NC * NH + B * NC + 3 * B + B * NH
    bytes_accessed = sum(int(a.size) * a.dtype.itemsize for a in args) \
        + (B * NKp + B * NCp) * 4

    # explicit VMEM budget sized to the resident arrays (with headroom)
    vmem_limit = int(min(64 * 1024 * 1024,
                         max(32 * 1024 * 1024, 4 * bytes_accessed)))

    vmem = lambda: pl.BlockSpec(memory_space=pltpu.MemorySpace.VMEM)
    out_shape = (jax.ShapeDtypeStruct((B, NKp), jnp.float32),
                 jax.ShapeDtypeStruct((B, NCp), jnp.float32))

    kw_full, col_full = pl.pallas_call(
        visquery_kernel,
        out_shape=out_shape,
        in_specs=[vmem() for _ in args],
        out_specs=(vmem(), vmem()),
        compiler_params=pltpu.CompilerParams(vmem_limit_bytes=vmem_limit),
        cost_estimate=pl.CostEstimate(flops=flops,
                                      transcendentals=transcendentals,
                                      bytes_accessed=bytes_accessed),
    )(*args)

    return {"keyword_logits": kw_full[:, :num_sql_keywords],
            "column_logits": col_full[:, :max_table_columns]}


if __name__ == "__main__":
    # small, self-consistent shapes
    batch = 2
    channels = 4
    time_points = 16
    hidden_dim = 32              # divisible by num_heads=8
    num_columns = 8              # columns in table_content
    num_sql_keywords = 16
    max_table_columns = 8

    root = jax.random.PRNGKey(0)
    k_params, k_te, k_qe, k_tc = jax.random.split(root, 4)

    params = init_params(k_params, channels=channels, time_points=time_points,
                         hidden_dim=hidden_dim,
                         num_sql_keywords=num_sql_keywords,
                         max_table_columns=max_table_columns)
    prep = prepare_params(params, hidden_dim=hidden_dim,
                          num_sql_keywords=num_sql_keywords,
                          max_table_columns=max_table_columns)

    table_eeg = jax.random.normal(k_te, (batch, channels, time_points), jnp.float32)
    query_eeg = jax.random.normal(k_qe, (batch, channels, time_points), jnp.float32)
    table_content = jax.random.normal(k_tc, (batch, num_columns, hidden_dim), jnp.float32)

    fwd = jax.jit(functools.partial(vis_query_forward,
                                    num_sql_keywords=num_sql_keywords,
                                    max_table_columns=max_table_columns))
    out = fwd(table_eeg, query_eeg, table_content, prep)
    jax.block_until_ready(out)

    assert out["keyword_logits"].shape == (batch, num_sql_keywords)
    assert out["column_logits"].shape == (batch, max_table_columns)
    print("KERNEL_OK")
</pallas_src>

<mosaic_0001>
module attributes {stable_mosaic.version = 11 : i64} {
  func.func @visquery_kernel(%arg0: memref<4x64xbf16, #tpu.memory_space<vmem>>, %arg1: memref<16x32xbf16, #tpu.memory_space<vmem>>, %arg2: memref<64x32xbf16, #tpu.memory_space<vmem>>, %arg3: memref<1x32xf32, #tpu.memory_space<vmem>>, %arg4: memref<32x32xbf16, #tpu.memory_space<vmem>>, %arg5: memref<1x32xf32, #tpu.memory_space<vmem>>, %arg6: memref<1x32xf32, #tpu.memory_space<vmem>>, %arg7: memref<1x32xf32, #tpu.memory_space<vmem>>, %arg8: memref<32x32xbf16, #tpu.memory_space<vmem>>, %arg9: memref<1x32xf32, #tpu.memory_space<vmem>>, %arg10: memref<32x64xbf16, #tpu.memory_space<vmem>>, %arg11: memref<1x64xf32, #tpu.memory_space<vmem>>, %arg12: memref<32x32xbf16, #tpu.memory_space<vmem>>, %arg13: memref<1x32xf32, #tpu.memory_space<vmem>>, %arg14: memref<32x8xbf16, #tpu.memory_space<vmem>>, %arg15: memref<8x32xbf16, #tpu.memory_space<vmem>>, %arg16: memref<32x64xbf16, #tpu.memory_space<vmem>>, %arg17: memref<32x64xbf16, #tpu.memory_space<vmem>>, %arg18: memref<1x64xf32, #tpu.memory_space<vmem>>, %arg19: memref<1x32xf32, #tpu.memory_space<vmem>>, %arg20: memref<1x32xf32, #tpu.memory_space<vmem>>, %arg21: memref<1x32xf32, #tpu.memory_space<vmem>>, %arg22: memref<1x32xf32, #tpu.memory_space<vmem>>, %arg23: memref<32x128xbf16, #tpu.memory_space<vmem>>, %arg24: memref<1x128xf32, #tpu.memory_space<vmem>>, %arg25: memref<32x128xbf16, #tpu.memory_space<vmem>>, %arg26: memref<1x128xf32, #tpu.memory_space<vmem>>, %arg27: memref<2x128xf32, #tpu.memory_space<vmem>>, %arg28: memref<2x128xf32, #tpu.memory_space<vmem>>) attributes {dimension_semantics = [], scalar_prefetch = 0 : i64, scratch_operands = 0 : i64, tpu.core_type = #tpu.core_type<tc>} {
    %c0 = arith.constant 0 : index
    %c0_0 = arith.constant 0 : index
    %0 = vector.load %arg0[%c0, %c0_0] : memref<4x64xbf16, #tpu.memory_space<vmem>>, vector<4x64xbf16>
    %c0_1 = arith.constant 0 : index
    %c0_2 = arith.constant 0 : index
    %1 = vector.load %arg2[%c0_1, %c0_2] : memref<64x32xbf16, #tpu.memory_space<vmem>>, vector<64x32xbf16>
    %cst = arith.constant dense<0.000000e+00> : vector<4x32xf32>
    %2 = tpu.matmul %0, %1, %cst {dimension_numbers = #tpu.dot_dimension_numbers<[1], [0], [0], [1], [0, 0, 1, 1], [], []>} : vector<4x64xbf16>, vector<64x32xbf16>, vector<4x32xf32> -> vector<4x32xf32>
    %c0_3 = arith.constant 0 : index
    %c0_4 = arith.constant 0 : index
    %3 = vector.load %arg3[%c0_3, %c0_4] : memref<1x32xf32, #tpu.memory_space<vmem>>, vector<1x32xf32>
    %4 = vector.broadcast %3 : vector<1x32xf32> to vector<4x32xf32>
    %5 = arith.addf %2, %4 : vector<4x32xf32>
    %6 = vector.extract_strided_slice %5 {offsets = [0, 0], sizes = [2, 32], strides = [1, 1]} : vector<4x32xf32> to vector<2x32xf32>
    %7 = vector.extract_strided_slice %5 {offsets = [2, 0], sizes = [2, 32], strides = [1, 1]} : vector<4x32xf32> to vector<2x32xf32>
    %c0_5 = arith.constant 0 : index
    %c0_6 = arith.constant 0 : index
    %8 = vector.load %arg1[%c0_5, %c0_6] : memref<16x32xbf16, #tpu.memory_space<vmem>>, vector<16x32xbf16>
    %c0_7 = arith.constant 0 : index
    %c0_8 = arith.constant 0 : index
    %9 = vector.load %arg4[%c0_7, %c0_8] : memref<32x32xbf16, #tpu.memory_space<vmem>>, vector<32x32xbf16>
    %cst_9 = arith.constant dense<0.000000e+00> : vector<16x32xf32>
    %10 = tpu.matmul %8, %9, %cst_9 {dimension_numbers = #tpu.dot_dimension_numbers<[1], [0], [0], [1], [0, 0, 1, 1], [], []>} : vector<16x32xbf16>, vector<32x32xbf16>, vector<16x32xf32> -> vector<16x32xf32>
    %c0_10 = arith.constant 0 : index
    %c0_11 = arith.constant 0 : index
    %11 = vector.load %arg5[%c0_10, %c0_11] : memref<1x32xf32, #tpu.memory_space<vmem>>, vector<1x32xf32>
    %12 = vector.broadcast %11 : vector<1x32xf32> to vector<16x32xf32>
    %13 = arith.addf %10, %12 : vector<16x32xf32>
    %c0_12 = arith.constant 0 : index
    %c0_13 = arith.constant 0 : index
    %14 = vector.load %arg6[%c0_12, %c0_13] : memref<1x32xf32, #tpu.memory_space<vmem>>, vector<1x32xf32>
    %c0_14 = arith.constant 0 : index
    %c0_15 = arith.constant 0 : index
    %15 = vector.load %arg7[%c0_14, %c0_15] : memref<1x32xf32, #tpu.memory_space<vmem>>, vector<1x32xf32>
    %cst_16 = arith.constant dense<0.000000e+00> : vector<16xf32>
    %16 = vector.multi_reduction <add>, %13, %cst_16 [1] : vector<16x32xf32> to vector<16xf32>
    %17 = vector.shape_cast %16 : vector<16xf32> to vector<16x1xf32>
    %cst_17 = arith.constant 3.200000e+01 : f32
    %18 = vector.broadcast %cst_17 : f32 to vector<16x1xf32>
    %19 = arith.divf %17, %18 : vector<16x1xf32>
    %20 = vector.broadcast %19 : vector<16x1xf32> to vector<16x32xf32>
    %21 = arith.subf %13, %20 : vector<16x32xf32>
    %22 = arith.mulf %21, %21 : vector<16x32xf32>
    %cst_18 = arith.constant dense<0.000000e+00> : vector<16xf32>
    %23 = vector.multi_reduction <add>, %22, %cst_18 [1] : vector<16x32xf32> to vector<16xf32>
    %24 = vector.shape_cast %23 : vector<16xf32> to vector<16x1xf32>
    %cst_19 = arith.constant 3.200000e+01 : f32
    %25 = vector.broadcast %cst_19 : f32 to vector<16x1xf32>
    %26 = arith.divf %24, %25 : vector<16x1xf32>
    %27 = vector.broadcast %19 : vector<16x1xf32> to vector<16x32xf32>
    %28 = arith.subf %13, %27 : vector<16x32xf32>
    %cst_20 = arith.constant 9.99999974E-6 : f32
    %29 = vector.broadcast %cst_20 : f32 to vector<16x1xf32>
    %30 = arith.addf %26, %29 : vector<16x1xf32>
    %31 = math.rsqrt %30 : vector<16x1xf32>
    %32 = vector.broadcast %31 : vector<16x1xf32> to vector<16x32xf32>
    %33 = arith.mulf %28, %32 : vector<16x32xf32>
    %34 = vector.broadcast %14 : vector<1x32xf32> to vector<16x32xf32>
    %35 = arith.mulf %33, %34 : vector<16x32xf32>
    %36 = vector.broadcast %15 : vector<1x32xf32> to vector<16x32xf32>
    %37 = arith.addf %35, %36 : vector<16x32xf32>
    %cst_21 = arith.constant 0.000000e+00 : f32
    %38 = vector.broadcast %cst_21 : f32 to vector<16x32xf32>
    %39 = arith.maximumf %37, %38 : vector<16x32xf32>
    %40 = arith.truncf %39 : vector<16x32xf32> to vector<16x32xbf16>
    %41 = arith.truncf %6 : vector<2x32xf32> to vector<2x32xbf16>
    %c0_22 = arith.constant 0 : index
    %c0_23 = arith.constant 0 : index
    %42 = vector.load %arg8[%c0_22, %c0_23] : memref<32x32xbf16, #tpu.memory_space<vmem>>, vector<32x32xbf16>
    %cst_24 = arith.constant dense<0.000000e+00> : vector<2x32xf32>
    %43 = tpu.matmul %41, %42, %cst_24 {dimension_numbers = #tpu.dot_dimension_numbers<[1], [0], [0], [1], [0, 0, 1, 1], [], []>} : vector<2x32xbf16>, vector<32x32xbf16>, vector<2x32xf32> -> vector<2x32xf32>
    %c0_25 = arith.constant 0 : index
    %c0_26 = arith.constant 0 : index
    %44 = vector.load %arg9[%c0_25, %c0_26] : memref<1x32xf32, #tpu.memory_space<vmem>>, vector<1x32xf32>
    %45 = vector.broadcast %44 : vector<1x32xf32> to vector<2x32xf32>
    %46 = arith.addf %43, %45 : vector<2x32xf32>
    %c0_27 = arith.constant 0 : index
    %c0_28 = arith.constant 0 : index
    %47 = vector.load %arg10[%c0_27, %c0_28] : memref<32x64xbf16, #tpu.memory_space<vmem>>, vector<32x64xbf16>
    %cst_29 = arith.constant dense<0.000000e+00> : vector<16x64xf32>
    %48 = tpu.matmul %40, %47, %cst_29 {dimension_numbers = #tpu.dot_dimension_numbers<[1], [0], [0], [1], [0, 0, 1, 1], [], []>} : vector<16x32xbf16>, vector<32x64xbf16>, vector<16x64xf32> -> vector<16x64xf32>
    %c0_30 = arith.constant 0 : index
    %c0_31 = arith.constant 0 : index
    %49 = vector.load %arg11[%c0_30, %c0_31] : memref<1x64xf32, #tpu.memory_space<vmem>>, vector<1x64xf32>
    %50 = vector.broadcast %49 : vector<1x64xf32> to vector<16x64xf32>
    %51 = arith.addf %48, %50 : vector<16x64xf32>
    %52 = vector.extract_strided_slice %51 {offsets = [0, 0], sizes = [16, 32], strides = [1, 1]} : vector<16x64xf32> to vector<16x32xf32>
    %53 = vector.extract_strided_slice %51 {offsets = [0, 32], sizes = [16, 32], strides = [1, 1]} : vector<16x64xf32> to vector<16x32xf32>
    %54 = vector.shape_cast %46 : vector<2x32xf32> to vector<2x1x32xf32>
    %55 = vector.shape_cast %52 : vector<16x32xf32> to vector<2x8x32xf32>
    %56 = vector.broadcast %54 : vector<2x1x32xf32> to vector<2x8x32xf32>
    %57 = arith.mulf %56, %55 : vector<2x8x32xf32>
    %58 = vector.shape_cast %57 : vector<2x8x32xf32> to vector<16x32xf32>
    %59 = arith.truncf %58 : vector<16x32xf32> to vector<16x32xbf16>
    %c0_32 = arith.constant 0 : index
    %c0_33 = arith.constant 0 : index
    %60 = vector.load %arg14[%c0_32, %c0_33] : memref<32x8xbf16, #tpu.memory_space<vmem>>, vector<32x8xbf16>
    %cst_34 = arith.constant dense<0.000000e+00> : vector<16x8xf32>
    %61 = tpu.matmul %59, %60, %cst_34 {dimension_numbers = #tpu.dot_dimension_numbers<[1], [0], [0], [1], [0, 0, 1, 1], [], []>} : vector<16x32xbf16>, vector<32x8xbf16>, vector<16x8xf32> -> vector<16x8xf32>
    %62 = vector.shape_cast %61 : vector<16x8xf32> to vector<2x8x8xf32>
    %cst_35 = arith.constant dense<0xFF800000> : vector<2x8xf32>
    %63 = vector.multi_reduction <maximumf>, %62, %cst_35 [1] : vector<2x8x8xf32> to vector<2x8xf32>
    %64 = vector.shape_cast %63 : vector<2x8xf32> to vector<2x1x8xf32>
    %65 = vector.broadcast %64 : vector<2x1x8xf32> to vector<2x8x8xf32>
    %66 = arith.subf %62, %65 : vector<2x8x8xf32>
    %67 = math.exp %66 : vector<2x8x8xf32>
    %cst_36 = arith.constant dense<0.000000e+00> : vector<2x8xf32>
    %68 = vector.multi_reduction <add>, %67, %cst_36 [1] : vector<2x8x8xf32> to vector<2x8xf32>
    %69 = vector.shape_cast %68 : vector<2x8xf32> to vector<2x1x8xf32>
    %70 = tpu.reciprocal %69 {approx = true} : vector<2x1x8xf32> -> vector<2x1x8xf32>
    %71 = vector.broadcast %70 : vector<2x1x8xf32> to vector<2x8x8xf32>
    %72 = arith.mulf %67, %71 : vector<2x8x8xf32>
    %73 = vector.shape_cast %72 : vector<2x8x8xf32> to vector<16x8xf32>
    %74 = arith.truncf %73 : vector<16x8xf32> to vector<16x8xbf16>
    %c0_37 = arith.constant 0 : index
    %c0_38 = arith.constant 0 : index
    %75 = vector.load %arg15[%c0_37, %c0_38] : memref<8x32xbf16, #tpu.memory_space<vmem>>, vector<8x32xbf16>
    %cst_39 = arith.constant dense<0.000000e+00> : vector<16x32xf32>
    %76 = tpu.matmul %74, %75, %cst_39 {dimension_numbers = #tpu.dot_dimension_numbers<[1], [0], [0], [1], [0, 0, 1, 1], [], []>} : vector<16x8xbf16>, vector<8x32xbf16>, vector<16x32xf32> -> vector<16x32xf32>
    %77 = arith.mulf %76, %53 : vector<16x32xf32>
    %78 = vector.shape_cast %77 : vector<16x32xf32> to vector<2x8x32xf32>
    %cst_40 = arith.constant dense<0.000000e+00> : vector<2x32xf32>
    %79 = vector.multi_reduction <add>, %78, %cst_40 [1] : vector<2x8x32xf32> to vector<2x32xf32>
    %80 = arith.truncf %79 : vector<2x32xf32> to vector<2x32xbf16>
    %c0_41 = arith.constant 0 : index
    %c0_42 = arith.constant 0 : index
    %81 = vector.load %arg12[%c0_41, %c0_42] : memref<32x32xbf16, #tpu.memory_space<vmem>>, vector<32x32xbf16>
    %cst_43 = arith.constant dense<0.000000e+00> : vector<2x32xf32>
    %82 = tpu.matmul %80, %81, %cst_43 {dimension_numbers = #tpu.dot_dimension_numbers<[1], [0], [0], [1], [0, 0, 1, 1], [], []>} : vector<2x32xbf16>, vector<32x32xbf16>, vector<2x32xf32> -> vector<2x32xf32>
    %c0_44 = arith.constant 0 : index
    %c0_45 = arith.constant 0 : index
    %83 = vector.load %arg13[%c0_44, %c0_45] : memref<1x32xf32, #tpu.memory_space<vmem>>, vector<1x32xf32>
    %84 = vector.broadcast %83 : vector<1x32xf32> to vector<2x32xf32>
    %85 = arith.addf %82, %84 : vector<2x32xf32>
    %86 = arith.truncf %85 : vector<2x32xf32> to vector<2x32xbf16>
    %c0_46 = arith.constant 0 : index
    %c0_47 = arith.constant 0 : index
    %87 = vector.load %arg16[%c0_46, %c0_47] : memref<32x64xbf16, #tpu.memory_space<vmem>>, vector<32x64xbf16>
    %cst_48 = arith.constant dense<0.000000e+00> : vector<2x64xf32>
    %88 = tpu.matmul %86, %87, %cst_48 {dimension_numbers = #tpu.dot_dimension_numbers<[1], [0], [0], [1], [0, 0, 1, 1], [], []>} : vector<2x32xbf16>, vector<32x64xbf16>, vector<2x64xf32> -> vector<2x64xf32>
    %89 = arith.truncf %7 : vector<2x32xf32> to vector<2x32xbf16>
    %c0_49 = arith.constant 0 : index
    %c0_50 = arith.constant 0 : index
    %90 = vector.load %arg17[%c0_49, %c0_50] : memref<32x64xbf16, #tpu.memory_space<vmem>>, vector<32x64xbf16>
    %cst_51 = arith.constant dense<0.000000e+00> : vector<2x64xf32>
    %91 = tpu.matmul %89, %90, %cst_51 {dimension_numbers = #tpu.dot_dimension_numbers<[1], [0], [0], [1], [0, 0, 1, 1], [], []>} : vector<2x32xbf16>, vector<32x64xbf16>, vector<2x64xf32> -> vector<2x64xf32>
    %92 = arith.addf %88, %91 : vector<2x64xf32>
    %c0_52 = arith.constant 0 : index
    %c0_53 = arith.constant 0 : index
    %93 = vector.load %arg18[%c0_52, %c0_53] : memref<1x64xf32, #tpu.memory_space<vmem>>, vector<1x64xf32>
    %94 = vector.broadcast %93 : vector<1x64xf32> to vector<2x64xf32>
    %95 = arith.addf %92, %94 : vector<2x64xf32>
    %96 = vector.extract_strided_slice %95 {offsets = [0, 0], sizes = [2, 32], strides = [1, 1]} : vector<2x64xf32> to vector<2x32xf32>
    %c0_54 = arith.constant 0 : index
    %c0_55 = arith.constant 0 : index
    %97 = vector.load %arg19[%c0_54, %c0_55] : memref<1x32xf32, #tpu.memory_space<vmem>>, vector<1x32xf32>
    %c0_56 = arith.constant 0 : index
    %c0_57 = arith.constant 0 : index
    %98 = vector.load %arg20[%c0_56, %c0_57] : memref<1x32xf32, #tpu.memory_space<vmem>>, vector<1x32xf32>
    %cst_58 = arith.constant dense<0.000000e+00> : vector<2xf32>
    %99 = vector.multi_reduction <add>, %96, %cst_58 [1] : vector<2x32xf32> to vector<2xf32>
    %100 = vector.shape_cast %99 : vector<2xf32> to vector<2x1xf32>
    %cst_59 = arith.constant 3.200000e+01 : f32
    %101 = vector.broadcast %cst_59 : f32 to vector<2x1xf32>
    %102 = arith.divf %100, %101 : vector<2x1xf32>
    %103 = vector.broadcast %102 : vector<2x1xf32> to vector<2x32xf32>
    %104 = arith.subf %96, %103 : vector<2x32xf32>
    %105 = arith.mulf %104, %104 : vector<2x32xf32>
    %cst_60 = arith.constant dense<0.000000e+00> : vector<2xf32>
    %106 = vector.multi_reduction <add>, %105, %cst_60 [1] : vector<2x32xf32> to vector<2xf32>
    %107 = vector.shape_cast %106 : vector<2xf32> to vector<2x1xf32>
    %cst_61 = arith.constant 3.200000e+01 : f32
    %108 = vector.broadcast %cst_61 : f32 to vector<2x1xf32>
    %109 = arith.divf %107, %108 : vector<2x1xf32>
    %110 = vector.broadcast %102 : vector<2x1xf32> to vector<2x32xf32>
    %111 = arith.subf %96, %110 : vector<2x32xf32>
    %cst_62 = arith.constant 9.99999974E-6 : f32
    %112 = vector.broadcast %cst_62 : f32 to vector<2x1xf32>
    %113 = arith.addf %109, %112 : vector<2x1xf32>
    %114 = math.rsqrt %113 : vector<2x1xf32>
    %115 = vector.broadcast %114 : vector<2x1xf32> to vector<2x32xf32>
    %116 = arith.mulf %111, %115 : vector<2x32xf32>
    %117 = vector.broadcast %97 : vector<1x32xf32> to vector<2x32xf32>
    %118 = arith.mulf %116, %117 : vector<2x32xf32>
    %119 = vector.broadcast %98 : vector<1x32xf32> to vector<2x32xf32>
    %120 = arith.addf %118, %119 : vector<2x32xf32>
    %cst_63 = arith.constant 0.000000e+00 : f32
    %121 = vector.broadcast %cst_63 : f32 to vector<2x32xf32>
    %122 = arith.maximumf %120, %121 : vector<2x32xf32>
    %123 = vector.extract_strided_slice %95 {offsets = [0, 32], sizes = [2, 32], strides = [1, 1]} : vector<2x64xf32> to vector<2x32xf32>
    %c0_64 = arith.constant 0 : index
    %c0_65 = arith.constant 0 : index
    %124 = vector.load %arg21[%c0_64, %c0_65] : memref<1x32xf32, #tpu.memory_space<vmem>>, vector<1x32xf32>
    %c0_66 = arith.constant 0 : index
    %c0_67 = arith.constant 0 : index
    %125 = vector.load %arg22[%c0_66, %c0_67] : memref<1x32xf32, #tpu.memory_space<vmem>>, vector<1x32xf32>
    %cst_68 = arith.constant dense<0.000000e+00> : vector<2xf32>
    %126 = vector.multi_reduction <add>, %123, %cst_68 [1] : vector<2x32xf32> to vector<2xf32>
    %127 = vector.shape_cast %126 : vector<2xf32> to vector<2x1xf32>
    %cst_69 = arith.constant 3.200000e+01 : f32
    %128 = vector.broadcast %cst_69 : f32 to vector<2x1xf32>
    %129 = arith.divf %127, %128 : vector<2x1xf32>
    %130 = vector.broadcast %129 : vector<2x1xf32> to vector<2x32xf32>
    %131 = arith.subf %123, %130 : vector<2x32xf32>
    %132 = arith.mulf %131, %131 : vector<2x32xf32>
    %cst_70 = arith.constant dense<0.000000e+00> : vector<2xf32>
    %133 = vector.multi_reduction <add>, %132, %cst_70 [1] : vector<2x32xf32> to vector<2xf32>
    %134 = vector.shape_cast %133 : vector<2xf32> to vector<2x1xf32>
    %cst_71 = arith.constant 3.200000e+01 : f32
    %135 = vector.broadcast %cst_71 : f32 to vector<2x1xf32>
    %136 = arith.divf %134, %135 : vector<2x1xf32>
    %137 = vector.broadcast %129 : vector<2x1xf32> to vector<2x32xf32>
    %138 = arith.subf %123, %137 : vector<2x32xf32>
    %cst_72 = arith.constant 9.99999974E-6 : f32
    %139 = vector.broadcast %cst_72 : f32 to vector<2x1xf32>
    %140 = arith.addf %136, %139 : vector<2x1xf32>
    %141 = math.rsqrt %140 : vector<2x1xf32>
    %142 = vector.broadcast %141 : vector<2x1xf32> to vector<2x32xf32>
    %143 = arith.mulf %138, %142 : vector<2x32xf32>
    %144 = vector.broadcast %124 : vector<1x32xf32> to vector<2x32xf32>
    %145 = arith.mulf %143, %144 : vector<2x32xf32>
    %146 = vector.broadcast %125 : vector<1x32xf32> to vector<2x32xf32>
    %147 = arith.addf %145, %146 : vector<2x32xf32>
    %cst_73 = arith.constant 0.000000e+00 : f32
    %148 = vector.broadcast %cst_73 : f32 to vector<2x32xf32>
    %149 = arith.maximumf %147, %148 : vector<2x32xf32>
    %150 = arith.truncf %122 : vector<2x32xf32> to vector<2x32xbf16>
    %c0_74 = arith.constant 0 : index
    %c0_75 = arith.constant 0 : index
    %151 = vector.load %arg23[%c0_74, %c0_75] : memref<32x128xbf16, #tpu.memory_space<vmem>>, vector<32x128xbf16>
    %cst_76 = arith.constant dense<0.000000e+00> : vector<2x128xf32>
    %152 = tpu.matmul %150, %151, %cst_76 {dimension_numbers = #tpu.dot_dimension_numbers<[1], [0], [0], [1], [0, 0, 1, 1], [], []>} : vector<2x32xbf16>, vector<32x128xbf16>, vector<2x128xf32> -> vector<2x128xf32>
    %c0_77 = arith.constant 0 : index
    %c0_78 = arith.constant 0 : index
    %153 = vector.load %arg24[%c0_77, %c0_78] : memref<1x128xf32, #tpu.memory_space<vmem>>, vector<1x128xf32>
    %154 = vector.broadcast %153 : vector<1x128xf32> to vector<2x128xf32>
    %155 = arith.addf %152, %154 : vector<2x128xf32>
    %c0_79 = arith.constant 0 : index
    %c0_80 = arith.constant 0 : index
    %156 = vector.load %arg27[%c0_79, %c0_80] : memref<2x128xf32, #tpu.memory_space<vmem>>, vector<2x128xf32>
    tpu.vector_store %arg27[%c0_79, %c0_80], %155 {strides = array<i32>} : memref<2x128xf32, #tpu.memory_space<vmem>>, vector<2x128xf32>,
    %157 = arith.truncf %149 : vector<2x32xf32> to vector<2x32xbf16>
    %c0_81 = arith.constant 0 : index
    %c0_82 = arith.constant 0 : index
    %158 = vector.load %arg25[%c0_81, %c0_82] : memref<32x128xbf16, #tpu.memory_space<vmem>>, vector<32x128xbf16>
    %cst_83 = arith.constant dense<0.000000e+00> : vector<2x128xf32>
    %159 = tpu.matmul %157, %158, %cst_83 {dimension_numbers = #tpu.dot_dimension_numbers<[1], [0], [0], [1], [0, 0, 1, 1], [], []>} : vector<2x32xbf16>, vector<32x128xbf16>, vector<2x128xf32> -> vector<2x128xf32>
    %c0_84 = arith.constant 0 : index
    %c0_85 = arith.constant 0 : index
    %160 = vector.load %arg26[%c0_84, %c0_85] : memref<1x128xf32, #tpu.memory_space<vmem>>, vector<1x128xf32>
    %161 = vector.broadcast %160 : vector<1x128xf32> to vector<2x128xf32>
    %162 = arith.addf %159, %161 : vector<2x128xf32>
    %c0_86 = arith.constant 0 : index
    %c0_87 = arith.constant 0 : index
    %163 = vector.load %arg28[%c0_86, %c0_87] : memref<2x128xf32, #tpu.memory_space<vmem>>, vector<2x128xf32>
    tpu.vector_store %arg28[%c0_86, %c0_87], %162 {strides = array<i32>} : memref<2x128xf32, #tpu.memory_space<vmem>>, vector<2x128xf32>,
    return
  }
}

</mosaic_0001>

<llo_original>
// kernel: vis_query_forward.1
$region0: #{vis_query_forward.1}
  #allocation0 [shape = 'u32[]', space=smem, size = 0x4, offset = 0x4, fixed_abs, tag = 'smem constant byte address 0x4 - core index']
  #allocation1 [shape = 'u32[72,128]{1,0:T(1,128)}', space=vmem, size = 0x9000, scoped, tag = 'internal scratch']
  %s0 = inlined_call_operand.vmem [shape: bf16[4,64], index: 0, kind: input, shape index: {}]
  %s1 = inlined_call_operand.vmem [shape: bf16[16,32], index: 1, kind: input, shape index: {}]
  %s2 = inlined_call_operand.vmem [shape: bf16[64,32], index: 2, kind: input, shape index: {}]
  %s3 = inlined_call_operand.hbm [shape: f32[1,32], index: 3, kind: input, shape index: {}]
  %s4 = inlined_call_operand.vmem [shape: bf16[32,32], index: 4, kind: input, shape index: {}]
  %s5 = inlined_call_operand.vmem [shape: f32[1,32], index: 5, kind: input, shape index: {}]
  %s6 = inlined_call_operand.vmem [shape: f32[1,32], index: 6, kind: input, shape index: {}]
  %s7 = inlined_call_operand.vmem [shape: f32[1,32], index: 7, kind: input, shape index: {}]
  %s8 = inlined_call_operand.vmem [shape: bf16[32,32], index: 8, kind: input, shape index: {}]
  %s9 = inlined_call_operand.hbm [shape: f32[1,32], index: 9, kind: input, shape index: {}]
  %s10 = inlined_call_operand.vmem [shape: bf16[32,64], index: 10, kind: input, shape index: {}]
  %s11 = inlined_call_operand.hbm [shape: f32[1,64], index: 11, kind: input, shape index: {}]
  %s12 = inlined_call_operand.vmem [shape: bf16[32,32], index: 12, kind: input, shape index: {}]
  %s13 = inlined_call_operand.hbm [shape: f32[1,32], index: 13, kind: input, shape index: {}]
  %s14 = inlined_call_operand.vmem [shape: bf16[32,8], index: 14, kind: input, shape index: {}]
  %s15 = inlined_call_operand.vmem [shape: bf16[8,32], index: 15, kind: input, shape index: {}]
  %s16 = inlined_call_operand.vmem [shape: bf16[32,64], index: 16, kind: input, shape index: {}]
  %s17 = inlined_call_operand.vmem [shape: bf16[32,64], index: 17, kind: input, shape index: {}]
  %s18 = inlined_call_operand.hbm [shape: f32[1,64], index: 18, kind: input, shape index: {}]
  %s19 = inlined_call_operand.vmem [shape: f32[1,32], index: 19, kind: input, shape index: {}]
  %s20 = inlined_call_operand.vmem [shape: f32[1,32], index: 20, kind: input, shape index: {}]
  %s21 = inlined_call_operand.hbm [shape: f32[1,32], index: 21, kind: input, shape index: {}]
  %s22 = inlined_call_operand.hbm [shape: f32[1,32], index: 22, kind: input, shape index: {}]
  %s23 = inlined_call_operand.vmem [shape: bf16[32,128], index: 23, kind: input, shape index: {}]
  %s24 = inlined_call_operand.hbm [shape: f32[1,128], index: 24, kind: input, shape index: {}]
  %s25 = inlined_call_operand.vmem [shape: bf16[32,128], index: 25, kind: input, shape index: {}]
  %s26 = inlined_call_operand.hbm [shape: f32[1,128], index: 26, kind: input, shape index: {}]
  %s27 = inlined_call_operand.hbm [shape: f32[2,128], index: 27, kind: output, shape index: {0}]
  %s28 = inlined_call_operand.hbm [shape: f32[2,128], index: 28, kind: output, shape index: {1}]
  %29 = xla_tuple %s27, %s28
  %s30 = sld [smem:[#allocation0]]
  $region162: #{vis_query_forward.1} parent=0
    _
  %s32 = ssub.s32 1, %s30
  %s33 = scalar_select 0, %s32, %s30
  $region1: #{vis_query_forward.1} parent=0
    #allocation2 [shape = 'u8[512]{0}', space=vmem, size = 0x400, scoped, tag = 'input window, operand 3, single buffered']
    #allocation3 [shape = 's32[1]{0}', space=sflag, size = 0x4, scoped, tag = 'scoped memory for vis_query_forward.1']
    #allocation4 [shape = 's32[1]{0}', space=sflag, size = 0x4, scoped, tag = 'scoped memory for vis_query_forward.1']
    #allocation5 [shape = 'u8[512]{0}', space=vmem, size = 0x400, scoped, tag = 'input window, operand 9, single buffered']
    #allocation6 [shape = 's32[1]{0}', space=sflag, size = 0x4, scoped, tag = 'scoped memory for vis_query_forward.1']
    #allocation7 [shape = 'u8[512]{0}', space=vmem, size = 0x400, scoped, tag = 'input window, operand 11, single buffered']
    #allocation8 [shape = 'u8[512]{0}', space=vmem, size = 0x400, scoped, tag = 'input window, operand 13, single buffered']
    #allocation9 [shape = 's32[1]{0}', space=sflag, size = 0x4, scoped, tag = 'scoped memory for vis_query_forward.1']
    #allocation10 [shape = 'u8[512]{0}', space=vmem, size = 0x400, scoped, tag = 'input window, operand 18, single buffered']
    #allocation11 [shape = 'u8[512]{0}', space=vmem, size = 0x400, scoped, tag = 'input window, operand 21, single buffered']
    #allocation12 [shape = 's32[1]{0}', space=sflag, size = 0x4, scoped, tag = 'scoped memory for vis_query_forward.1']
    #allocation13 [shape = 'u8[512]{0}', space=vmem, size = 0x400, scoped, tag = 'input window, operand 22, single buffered']
    #allocation14 [shape = 'u8[512]{0}', space=vmem, size = 0x400, scoped, tag = 'input window, operand 24, single buffered']
    #allocation15 [shape = 's32[1]{0}', space=sflag, size = 0x4, scoped, tag = 'scoped memory for vis_query_forward.1']
    #allocation16 [shape = 'u8[512]{0}', space=vmem, size = 0x400, scoped, tag = 'input window, operand 26, single buffered']
    #allocation17 [shape = 'u8[1024]{0}', space=vmem, size = 0x400, scoped, tag = 'output window, operand 0, single buffered']
    #allocation18 [shape = 'u8[1024]{0}', space=vmem, size = 0x400, scoped, tag = 'output window, operand 1, single buffered']
    #allocation19 [shape = 's32[1]{0}', space=sflag, size = 0x4, scoped, tag = 'scoped memory for vis_query_forward.1']
    %34 = vsyncpa [#allocation3], 0
    %35 = vsyncpa [#allocation6], 0
    %36 = vsyncpa [#allocation9], 0
    %37 = vsyncpa [#allocation12], 0
    %38 = vsyncpa [#allocation15], 0
    %39 = vsyncpa [#allocation4], 0
    %40 = vsyncpa [#allocation19], 0
    // Predicated region
    $region2: #{vis_query_forward.1} parent=1 // pred_check
      _
    $region3: #{vis_query_forward.1} parent=1 // pred_check_branch
      %42 = sbr.rel (0) target = $region5
    $region4: #{vis_query_forward.1} parent=1 // pred_region
      _
    $region5: #{vis_query_forward.1} parent=1 // pred_fallthru
      _
    // Predicated region
    $region6: #{vis_query_forward.1} parent=1 // pred_check
      _
    $region7: #{vis_query_forward.1} parent=1 // pred_check_branch
      %44 = sbr.rel (0) target = $region9
    $region8: #{vis_query_forward.1} parent=1 // pred_region
      _
    $region9: #{vis_query_forward.1} parent=1 // pred_fallthru
      _
    // Predicated region
    $region10: #{vis_query_forward.1} parent=1 // pred_check
      _
    $region11: #{vis_query_forward.1} parent=1 // pred_check_branch
      %46 = sbr.rel (0) target = $region13
    $region12: #{vis_query_forward.1} parent=1 // pred_region
      _
    $region13: #{vis_query_forward.1} parent=1 // pred_fallthru
      _
    // Predicated region
    $region14: #{vis_query_forward.1} parent=1 // pred_check
      _
    $region15: #{vis_query_forward.1} parent=1 // pred_check_branch
      %48 = sbr.rel (0) target = $region17
    $region16: #{vis_query_forward.1} parent=1 // pred_region
      %50 = vsyncadd [#allocation3], 0
      %s52 = sshll.u32 %s3, 4
      %s53 = int_to_ptr.hbm [resolvable:$true] %s52
      %s54 = sshll.u32 [#allocation2], 4
      %s55 = int_to_ptr.vmem [resolvable:$true] %s54
      %57 = dma.hbm_to_vmem [thread:$0]  %s53, 16, %s55, [#allocation3]
    $region17: #{vis_query_forward.1} parent=1 // pred_fallthru
      _
    // Predicated region
    $region18: #{vis_query_forward.1} parent=1 // pred_check
      _
    $region19: #{vis_query_forward.1} parent=1 // pred_check_branch
      %59 = sbr.rel (0) target = $region21
    $region20: #{vis_query_forward.1} parent=1 // pred_region
      _
    $region21: #{vis_query_forward.1} parent=1 // pred_fallthru
      _
    // Predicated region
    $region22: #{vis_query_forward.1} parent=1 // pred_check
      _
    $region23: #{vis_query_forward.1} parent=1 // pred_check_branch
      %61 = sbr.rel (0) target = $region25
    $region24: #{vis_query_forward.1} parent=1 // pred_region
      _
    $region25: #{vis_query_forward.1} parent=1 // pred_fallthru
      _
    // Predicated region
    $region26: #{vis_query_forward.1} parent=1 // pred_check
      _
    $region27: #{vis_query_forward.1} parent=1 // pred_check_branch
      %63 = sbr.rel (0) target = $region29
    $region28: #{vis_query_forward.1} parent=1 // pred_region
      _
    $region29: #{vis_query_forward.1} parent=1 // pred_fallthru
      _
    // Predicated region
    $region30: #{vis_query_forward.1} parent=1 // pred_check
      _
    $region31: #{vis_query_forward.1} parent=1 // pred_check_branch
      %65 = sbr.rel (0) target = $region33
    $region32: #{vis_query_forward.1} parent=1 // pred_region
      _
    $region33: #{vis_query_forward.1} parent=1 // pred_fallthru
      _
    // Predicated region
    $region34: #{vis_query_forward.1} parent=1 // pred_check
      _
    $region35: #{vis_query_forward.1} parent=1 // pred_check_branch
      %67 = sbr.rel (0) target = $region37
    $region36: #{vis_query_forward.1} parent=1 // pred_region
      _
    $region37: #{vis_query_forward.1} parent=1 // pred_fallthru
      _
    // Predicated region
    $region38: #{vis_query_forward.1} parent=1 // pred_check
      _
    $region39: #{vis_query_forward.1} parent=1 // pred_check_branch
      %69 = sbr.rel (0) target = $region41
    $region40: #{vis_query_forward.1} parent=1 // pred_region
      %71 = vsyncadd [#allocation6], 0
      %s73 = sshll.u32 %s9, 4
      %s74 = int_to_ptr.hbm [resolvable:$true] %s73
      %s75 = sshll.u32 [#allocation5], 4
      %s76 = int_to_ptr.vmem [resolvable:$true] %s75
      %78 = dma.hbm_to_vmem [thread:$0]  %s74, 16, %s76, [#allocation6]
    $region41: #{vis_query_forward.1} parent=1 // pred_fallthru
      _
    // Predicated region
    $region42: #{vis_query_forward.1} parent=1 // pred_check
      _
    $region43: #{vis_query_forward.1} parent=1 // pred_check_branch
      %80 = sbr.rel (0) target = $region45
    $region44: #{vis_query_forward.1} parent=1 // pred_region
      _
    $region45: #{vis_query_forward.1} parent=1 // pred_fallthru
      _
    // Predicated region
    $region46: #{vis_query_forward.1} parent=1 // pred_check
      _
    $region47: #{vis_query_forward.1} parent=1 // pred_check_branch
      %82 = sbr.rel (0) target = $region49
    $region48: #{vis_query_forward.1} parent=1 // pred_region
      %84 = vsyncadd [#allocation6], 0
      %s86 = sshll.u32 %s11, 4
      %s87 = int_to_ptr.hbm [resolvable:$true] %s86
      %s88 = sshll.u32 [#allocation7], 4
      %s89 = int_to_ptr.vmem [resolvable:$true] %s88
      %91 = dma.hbm_to_vmem [thread:$0]  %s87, 16, %s89, [#allocation6]
    $region49: #{vis_query_forward.1} parent=1 // pred_fallthru
      _
    // Predicated region
    $region50: #{vis_query_forward.1} parent=1 // pred_check
      _
    $region51: #{vis_query_forward.1} parent=1 // pred_check_branch
      %93 = sbr.rel (0) target = $region53
    $region52: #{vis_query_forward.1} parent=1 // pred_region
      _
    $region53: #{vis_query_forward.1} parent=1 // pred_fallthru
      _
    // Predicated region
    $region54: #{vis_query_forward.1} parent=1 // pred_check
      _
    $region55: #{vis_query_forward.1} parent=1 // pred_check_branch
      %95 = sbr.rel (0) target = $region57
    $region56: #{vis_query_forward.1} parent=1 // pred_region
      %97 = vsyncadd [#allocation9], 0
      %s99 = sshll.u32 %s13, 4
      %s100 = int_to_ptr.hbm [resolvable:$true] %s99
      %s101 = sshll.u32 [#allocation8], 4
      %s102 = int_to_ptr.vmem [resolvable:$true] %s101
      %104 = dma.hbm_to_vmem [thread:$0]  %s100, 16, %s102, [#allocation9]
    $region57: #{vis_query_forward.1} parent=1 // pred_fallthru
      _
    // Predicated region
    $region58: #{vis_query_forward.1} parent=1 // pred_check
      _
    $region59: #{vis_query_forward.1} parent=1 // pred_check_branch
      %106 = sbr.rel (0) target = $region61
    $region60: #{vis_query_forward.1} parent=1 // pred_region
      _
    $region61: #{vis_query_forward.1} parent=1 // pred_fallthru
      _
    // Predicated region
    $region62: #{vis_query_forward.1} parent=1 // pred_check
      _
    $region63: #{vis_query_forward.1} parent=1 // pred_check_branch
      %108 = sbr.rel (0) target = $region65
    $region64: #{vis_query_forward.1} parent=1 // pred_region
      _
    $region65: #{vis_query_forward.1} parent=1 // pred_fallthru
      _
    // Predicated region
    $region66: #{vis_query_forward.1} parent=1 // pred_check
      _
    $region67: #{vis_query_forward.1} parent=1 // pred_check_branch
      %110 = sbr.rel (0) target = $region69
    $region68: #{vis_query_forward.1} parent=1 // pred_region
      _
    $region69: #{vis_query_forward.1} parent=1 // pred_fallthru
      _
    // Predicated region
    $region70: #{vis_query_forward.1} parent=1 // pred_check
      _
    $region71: #{vis_query_forward.1} parent=1 // pred_check_branch
      %112 = sbr.rel (0) target = $region73
    $region72: #{vis_query_forward.1} parent=1 // pred_region
      _
    $region73: #{vis_query_forward.1} parent=1 // pred_fallthru
      _
    // Predicated region
    $region74: #{vis_query_forward.1} parent=1 // pred_check
      _
    $region75: #{vis_query_forward.1} parent=1 // pred_check_branch
      %114 = sbr.rel (0) target = $region77
    $region76: #{vis_query_forward.1} parent=1 // pred_region
      %116 = vsyncadd [#allocation9], 0
      %s118 = sshll.u32 %s18, 4
      %s119 = int_to_ptr.hbm [resolvable:$true] %s118
      %s120 = sshll.u32 [#allocation10], 4
      %s121 = int_to_ptr.vmem [resolvable:$true] %s120
      %123 = dma.hbm_to_vmem [thread:$0]  %s119, 16, %s121, [#allocation9]
    $region77: #{vis_query_forward.1} parent=1 // pred_fallthru
      _
    // Predicated region
    $region78: #{vis_query_forward.1} parent=1 // pred_check
      _
    $region79: #{vis_query_forward.1} parent=1 // pred_check_branch
      %125 = sbr.rel (0) target = $region81
    $region80: #{vis_query_forward.1} parent=1 // pred_region
      _
    $region81: #{vis_query_forward.1} parent=1 // pred_fallthru
      _
    // Predicated region
    $region82: #{vis_query_forward.1} parent=1 // pred_check
      _
    $region83: #{vis_query_forward.1} parent=1 // pred_check_branch
      %127 = sbr.rel (0) target = $region85
    $region84: #{vis_query_forward.1} parent=1 // pred_region
      _
    $region85: #{vis_query_forward.1} parent=1 // pred_fallthru
      _
    // Predicated region
    $region86: #{vis_query_forward.1} parent=1 // pred_check
      _
    $region87: #{vis_query_forward.1} parent=1 // pred_check_branch
      %129 = sbr.rel (0) target = $region89
    $region88: #{vis_query_forward.1} parent=1 // pred_region
      %131 = vsyncadd [#allocation12], 0
      %s133 = sshll.u32 %s21, 4
      %s134 = int_to_ptr.hbm [resolvable:$true] %s133
      %s135 = sshll.u32 [#allocation11], 4
      %s136 = int_to_ptr.vmem [resolvable:$true] %s135
      %138 = dma.hbm_to_vmem [thread:$0]  %s134, 16, %s136, [#allocation12]
    $region89: #{vis_query_forward.1} parent=1 // pred_fallthru
      _
    // Predicated region
    $region90: #{vis_query_forward.1} parent=1 // pred_check
      _
    $region91: #{vis_query_forward.1} parent=1 // pred_check_branch
      %140 = sbr.rel (0) target = $region93
    $region92: #{vis_query_forward.1} parent=1 // pred_region
      %142 = vsyncadd [#allocation12], 0
      %s144 = sshll.u32 %s22, 4
      %s145 = int_to_ptr.hbm [resolvable:$true] %s144
      %s146 = sshll.u32 [#allocation13], 4
      %s147 = int_to_ptr.vmem [resolvable:$true] %s146
      %149 = dma.hbm_to_vmem [thread:$0]  %s145, 16, %s147, [#allocation12]
    $region93: #{vis_query_forward.1} parent=1 // pred_fallthru
      _
    // Predicated region
    $region94: #{vis_query_forward.1} parent=1 // pred_check
      _
    $region95: #{vis_query_forward.1} parent=1 // pred_check_branch
      %151 = sbr.rel (0) target = $region97
    $region96: #{vis_query_forward.1} parent=1 // pred_region
      _
    $region97: #{vis_query_forward.1} parent=1 // pred_fallthru
      _
    // Predicated region
    $region98: #{vis_query_forward.1} parent=1 // pred_check
      _
    $region99: #{vis_query_forward.1} parent=1 // pred_check_branch
      %153 = sbr.rel (0) target = $region101
    $region100: #{vis_query_forward.1} parent=1 // pred_region
      %155 = vsyncadd [#allocation15], 0
      %s157 = sshll.u32 %s24, 4
      %s158 = int_to_ptr.hbm [resolvable:$true] %s157
      %s159 = sshll.u32 [#allocation14], 4
      %s160 = int_to_ptr.vmem [resolvable:$true] %s159
      %162 = dma.hbm_to_vmem [thread:$0]  %s158, 16, %s160, [#allocation15]
    $region101: #{vis_query_forward.1} parent=1 // pred_fallthru
      _
    // Predicated region
    $region102: #{vis_query_forward.1} parent=1 // pred_check
      _
    $region103: #{vis_query_forward.1} parent=1 // pred_check_branch
      %164 = sbr.rel (0) target = $region105
    $region104: #{vis_query_forward.1} parent=1 // pred_region
      _
    $region105: #{vis_query_forward.1} parent=1 // pred_fallthru
      _
    // Predicated region
    $region106: #{vis_query_forward.1} parent=1 // pred_check
      _
    $region107: #{vis_query_forward.1} parent=1 // pred_check_branch
      %166 = sbr.rel (0) target = $region109
    $region108: #{vis_query_forward.1} parent=1 // pred_region
      %168 = vsyncadd [#allocation15], 0
      %s170 = sshll.u32 %s26, 4
      %s171 = int_to_ptr.hbm [resolvable:$true] %s170
      %s172 = sshll.u32 [#allocation16], 4
      %s173 = int_to_ptr.vmem [resolvable:$true] %s172
      %175 = dma.hbm_to_vmem [thread:$0]  %s171, 16, %s173, [#allocation15]
    $region109: #{vis_query_forward.1} parent=1 // pred_fallthru
      _
    // Predicated region
    $region110: #{vis_query_forward.1} parent=1 // pred_check
      _
    $region111: #{vis_query_forward.1} parent=1 // pred_check_branch
      %177 = sbr.rel (0) target = $region113
    $region112: #{vis_query_forward.1} parent=1 // pred_region
      %179 = dma.done [#allocation3], 16
    $region113: #{vis_query_forward.1} parent=1 // pred_fallthru
      _
    // Predicated region
    $region114: #{vis_query_forward.1} parent=1 // pred_check
      _
    $region115: #{vis_query_forward.1} parent=1 // pred_check_branch
      %181 = sbr.rel (0) target = $region117
    $region116: #{vis_query_forward.1} parent=1 // pred_region
      %183 = dma.done [#allocation6], 16
    $region117: #{vis_query_forward.1} parent=1 // pred_fallthru
      _
    // Predicated region
    $region118: #{vis_query_forward.1} parent=1 // pred_check
      _
    $region119: #{vis_query_forward.1} parent=1 // pred_check_branch
      %185 = sbr.rel (0) target = $region121
    $region120: #{vis_query_forward.1} parent=1 // pred_region
      %187 = dma.done [#allocation6], 16
    $region121: #{vis_query_forward.1} parent=1 // pred_fallthru
      _
    // Predicated region
    $region122: #{vis_query_forward.1} parent=1 // pred_check
      _
    $region123: #{vis_query_forward.1} parent=1 // pred_check_branch
      %189 = sbr.rel (0) target = $region125
    $region124: #{vis_query_forward.1} parent=1 // pred_region
      %191 = dma.done [#allocation9], 16
    $region125: #{vis_query_forward.1} parent=1 // pred_fallthru
      _
    // Predicated region
    $region126: #{vis_query_forward.1} parent=1 // pred_check
      _
    $region127: #{vis_query_forward.1} parent=1 // pred_check_branch
      %193 = sbr.rel (0) target = $region129
    $region128: #{vis_query_forward.1} parent=1 // pred_region
      %195 = dma.done [#allocation9], 16
    $region129: #{vis_query_forward.1} parent=1 // pred_fallthru
      _
    // Predicated region
    $region130: #{vis_query_forward.1} parent=1 // pred_check
      _
    $region131: #{vis_query_forward.1} parent=1 // pred_check_branch
      %197 = sbr.rel (0) target = $region133
    $region132: #{vis_query_forward.1} parent=1 // pred_region
      %199 = dma.done [#allocation12], 16
    $region133: #{vis_query_forward.1} parent=1 // pred_fallthru
      _
    // Predicated region
    $region134: #{vis_query_forward.1} parent=1 // pred_check
      _
    $region135: #{vis_query_forward.1} parent=1 // pred_check_branch
      %201 = sbr.rel (0) target = $region137
    $region136: #{vis_query_forward.1} parent=1 // pred_region
      %203 = dma.done [#allocation12], 16
    $region137: #{vis_query_forward.1} parent=1 // pred_fallthru
      _
    // Predicated region
    $region138: #{vis_query_forward.1} parent=1 // pred_check
      _
    $region139: #{vis_query_forward.1} parent=1 // pred_check_branch
      %205 = sbr.rel (0) target = $region141
    $region140: #{vis_query_forward.1} parent=1 // pred_region
      %207 = dma.done [#allocation15], 16
    $region141: #{vis_query_forward.1} parent=1 // pred_fallthru
      _
    // Predicated region
    $region142: #{vis_query_forward.1} parent=1 // pred_check
      _
    $region143: #{vis_query_forward.1} parent=1 // pred_check_branch
      %209 = sbr.rel (0) target = $region145
    $region144: #{vis_query_forward.1} parent=1 // pred_region
      %211 = dma.done [#allocation15], 16
    $region145: #{vis_query_forward.1} parent=1 // pred_fallthru
      _
    %v213 = vld [vmem:[%s0] sm:$0x3]
    %v214 = vld [vmem:[%s2] sm:$0xf]
    %v215 = vld [vmem:[%s2 + $0x4] sm:$0xf]
    %v216 = vld [vmem:[%s2 + $0x8] sm:$0xf]
    %v217 = vld [vmem:[%s2 + $0xc] sm:$0xf]
    %v218 = vld [vmem:[%s2 + $0x10] sm:$0xf]
    %v219 = vld [vmem:[%s2 + $0x14] sm:$0xf]
    %v220 = vld [vmem:[%s2 + $0x18] sm:$0xf]
    %v221 = vld [vmem:[%s2 + $0x1c] sm:$0xf]
    %v222 = vld [vmem:[#allocation2] sm:$0x1]
    %v224 = vperm.slane %v222, 0
    %v234 = vunpack.c.l.b16 %v214
    %v235 = vunpack.c.l.b16 %v215
    %v236 = vunpack.c.l.b16 %v216
    %v237 = vunpack.c.l.b16 %v217
    %v238 = vunpack.c.l.b16 %v218
    %v239 = vunpack.c.l.b16 %v219
    %v240 = vunpack.c.l.b16 %v220
    %v241 = vunpack.c.l.b16 %v221
    %v242 = vpack.c.b16 %v235, %v234
    %v243 = vpack.c.b16 %v237, %v236
    %v244 = vpack.c.b16 %v239, %v238
    %v245 = vpack.c.b16 %v241, %v240
    %vm250 = vcmask 523264
    %v252 = vsel %vm250, %v213, 0
    %254 = vmatpush.bf16.msra.mxu0 0
    %255 = vmatpush.bf16.msra.mxu0 0
    %256 = vmatpush.bf16.msra.mxu0 0
    %257 = vmatpush.bf16.msra.mxu0 0
    %258 = vmatpush.bf16.msra.mxu0 %v245
    %259 = vmatpush.bf16.msra.mxu0 %v244
    %260 = vmatpush.bf16.msra.mxu0 %v243
    %261 = vmatpush.bf16.msra.mxu0 %v242
    %262 = vmatmul.bf16.gmra.mxu0 %v252
    %v263 = vpop.f32.mrf.mxu0
    %v264 = vadd.f32 %v224, %v263
    %v265 = vpop.f32.mrf.mxu0
    %266 = vdwg.mxu0
    %v267 = vld [vmem:[%s1] sm:$0xf]
    %v268 = vld [vmem:[%s1 + $0x4] sm:$0xf]
    %v269 = vld [vmem:[%s4] sm:$0xf]
    %v270 = vld [vmem:[%s4 + $0x4] sm:$0xf]
    %v271 = vld [vmem:[%s4 + $0x8] sm:$0xf]
    %v272 = vld [vmem:[%s4 + $0xc] sm:$0xf]
    %v273 = vld [vmem:[%s5] sm:$0x1]
    %v275 = vperm.slane %v273, 0
    %v279 = vunpack.c.l.b16 %v267
    %v280 = vunpack.c.l.b16 %v268
    %v281 = vpack.c.b16 %v280, %v279
    %v286 = vunpack.c.l.b16 %v269
    %v287 = vunpack.c.l.b16 %v270
    %v288 = vunpack.c.l.b16 %v271
    %v289 = vunpack.c.l.b16 %v272
    %v290 = vpack.c.b16 %v287, %v286
    %v291 = vpack.c.b16 %v289, %v288
    %vm294 = vcmask 261120
    %v296 = vsel %vm294, %v281, 0
    %298 = vmatpush.bf16.msra.mxu0 0
    %299 = vmatpush.bf16.msra.mxu0 0
    %300 = vmatpush.bf16.msra.mxu0 0
    %301 = vmatpush.bf16.msra.mxu0 0
    %302 = vmatpush.bf16.msra.mxu0 0
    %303 = vmatpush.bf16.msra.mxu0 0
    %304 = vmatpush.bf16.msra.mxu0 %v291
    %305 = vmatpush.bf16.msra.mxu0 %v290
    %306 = vmatmul.bf16.gmra.mxu0 %v296
    %v307 = vpop.f32.mrf.mxu0
    %v308 = vadd.f32 %v275, %v307
    %v309 = vpop.f32.mrf.mxu0
    %v310 = vadd.f32 %v275, %v309
    %311 = vdwg.mxu0
    %v312 = vld [vmem:[%s6] sm:$0x1]
    %v313 = vld [vmem:[%s7] sm:$0x1]
    %v314 = vsel %vm294, %v308, 0.0
    %315 = vadd.xlane.f32.xlu0 %v314
    %v316 = vpop.xlane.xlu0 %315
    %v317 = vsel %vm294, %v310, 0.0
    %318 = vadd.xlane.f32.xlu0 %v317
    %v319 = vpop.xlane.xlu0 %318
    %v320 = vrcp.pop 32.0
    %v321 = vmul.f32 32.0, %v320
    %v322 = vsub.f32 1.0, %v321
    %v323 = vmul.f32 %v320, %v322
    %v324 = vadd.f32 %v320, %v323
    %vm325 = vweird.f32 %v320
    %v326 = vsel %vm325, %v320, %v324
    %v327 = vmul.f32 %v316, %v326
    %v328 = vmul.f32 %v319, %v326
    %v329 = vsub.f32 %v308, %v327
    %v330 = vsub.f32 %v310, %v328
    %v331 = vmul.f32 %v329, %v329
    %v332 = vmul.f32 %v330, %v330
    %v333 = vsel %vm294, %v331, 0.0
    %334 = vadd.xlane.f32.xlu0 %v333
    %v335 = vpop.xlane.xlu0 %334
    %v336 = vsel %vm294, %v332, 0.0
    %337 = vadd.xlane.f32.xlu0 %v336
    %v338 = vpop.xlane.xlu0 %337
    %v339 = vmul.f32 %v335, %v326
    %v340 = vmul.f32 %v338, %v326
    %v341 = vadd.f32 %v339, 1e-05
    %v342 = vadd.f32 %v340, 1e-05
    %v343 = vrsqrt.pop %v341
    %v344 = vmul.f32 %v343, %v341
    %v345 = vmul.f32 %v344, %v343
    %v346 = vmul.f32 0.5, %v345
    %v347 = vsub.f32 1.5, %v346
    %v348 = vmul.f32 %v343, %v347
    %vm349 = vweird.f32 %v341
    %vm350 = vweird.f32 %v343
    %vm351 = vmor %vm349, %vm350
    %v352 = vsel %vm351, %v343, %v348
    %v353 = vrsqrt.pop %v342
    %v354 = vmul.f32 %v353, %v342
    %v355 = vmul.f32 %v354, %v353
    %v356 = vmul.f32 0.5, %v355
    %v357 = vsub.f32 1.5, %v356
    %v358 = vmul.f32 %v353, %v357
    %vm359 = vweird.f32 %v342
    %vm360 = vweird.f32 %v353
    %vm361 = vmor %vm359, %vm360
    %v362 = vsel %vm361, %v353, %v358
    %v363 = vmul.f32 %v329, %v352
    %v364 = vmul.f32 %v330, %v362
    %v366 = vperm.slane %v312, 0
    %v368 = vmul.f32 %v363, %v366
    %v369 = vmul.f32 %v364, %v366
    %v371 = vperm.slane %v313, 0
    %v373 = vadd.f32 %v368, %v371
    %v374 = vadd.f32 %v369, %v371
    %v375 = vmax.f32 %v373, 0.0
    %v376 = vmax.f32 %v374, 0.0
    %v377 = vpack.c.bf16 %v376, %v375
    %v378 = vpack.c.bf16 %v264, %v264
    %v379 = vld [vmem:[%s8] sm:$0xf]
    %v380 = vld [vmem:[%s8 + $0x4] sm:$0xf]
    %v381 = vld [vmem:[%s8 + $0x8] sm:$0xf]
    %v382 = vld [vmem:[%s8 + $0xc] sm:$0xf]
    %v383 = vld [vmem:[#allocation5] sm:$0x1]
    %v385 = vperm.slane %v383, 0
    %v391 = vunpack.c.l.b16 %v379
    %v392 = vunpack.c.l.b16 %v380
    %v393 = vunpack.c.l.b16 %v381
    %v394 = vunpack.c.l.b16 %v382
    %v395 = vpack.c.b16 %v392, %v391
    %v396 = vpack.c.b16 %v394, %v393
    %v400 = vsel %vm294, %v378, 0
    %402 = vmatpush.bf16.msra.mxu0 0
    %403 = vmatpush.bf16.msra.mxu0 0
    %404 = vmatpush.bf16.msra.mxu0 0
    %405 = vmatpush.bf16.msra.mxu0 0
    %406 = vmatpush.bf16.msra.mxu0 0
    %407 = vmatpush.bf16.msra.mxu0 0
    %408 = vmatpush.bf16.msra.mxu0 %v396
    %409 = vmatpush.bf16.msra.mxu0 %v395
    %410 = vmatmul.bf16.gmra.mxu0 %v400
    %v411 = vpop.f32.mrf.mxu0
    %v412 = vadd.f32 %v385, %v411
    %v413 = vpop.f32.mrf.mxu0
    %414 = vdwg.mxu0
    %v415 = vld [vmem:[%s10] sm:$0xf]
    %v416 = vld [vmem:[%s10 + $0x4] sm:$0xf]
    %v417 = vld [vmem:[%s10 + $0x8] sm:$0xf]
    %v418 = vld [vmem:[%s10 + $0xc] sm:$0xf]
    %v419 = vld [vmem:[#allocation7] sm:$0x1]
    %v421 = vperm.slane %v419, 0
    %v427 = vunpack.c.l.b16 %v415
    %v428 = vunpack.c.l.b16 %v416
    %v429 = vunpack.c.l.b16 %v417
    %v430 = vunpack.c.l.b16 %v418
    %v431 = vpack.c.b16 %v428, %v427
    %v432 = vpack.c.b16 %v430, %v429
    %v436 = vsel %vm294, %v377, 0
    %438 = vmatpush.bf16.msra.mxu0 0
    %439 = vmatpush.bf16.msra.mxu0 0
    %440 = vmatpush.bf16.msra.mxu0 0
    %441 = vmatpush.bf16.msra.mxu0 0
    %442 = vmatpush.bf16.msra.mxu0 0
    %443 = vmatpush.bf16.msra.mxu0 0
    %444 = vmatpush.bf16.msra.mxu0 %v432
    %445 = vmatpush.bf16.msra.mxu0 %v431
    %446 = vmatmul.bf16.gmra.mxu0 %v436
    %v447 = vpop.f32.mrf.mxu0
    %v448 = vadd.f32 %v421, %v447
    %v449 = vpop.f32.mrf.mxu0
    %v450 = vadd.f32 %v421, %v449
    %451 = vdwg.mxu0
    %v453 = vrot.slane %v412, 1
    %v454 = vperm.slane %v412, 0
    %v455 = vperm.slane %v453, 0
    %v458 = vmul.f32 %v454, %v448
    %v459 = vmul.f32 %v455, %v450
    %v460 = vpack.c.bf16 %v459, %v458
    %v461 = vld [vmem:[%s14] sm:$0xf]
    %v462 = vld [vmem:[%s14 + $0x4] sm:$0xf]
    %v463 = vld [vmem:[%s14 + $0x8] sm:$0xf]
    %v464 = vld [vmem:[%s14 + $0xc] sm:$0xf]
    %v469 = vunpack.c.l.b16 %v461
    %v470 = vunpack.c.l.b16 %v462
    %v471 = vunpack.c.l.b16 %v463
    %v472 = vunpack.c.l.b16 %v464
    %v473 = vpack.c.b16 %v470, %v469
    %v474 = vpack.c.b16 %v472, %v471
    %v478 = vsel %vm294, %v460, 0
    %480 = vmatpush.bf16.msra.mxu0 0
    %481 = vmatpush.bf16.msra.mxu0 0
    %482 = vmatpush.bf16.msra.mxu0 0
    %483 = vmatpush.bf16.msra.mxu0 0
    %484 = vmatpush.bf16.msra.mxu0 0
    %485 = vmatpush.bf16.msra.mxu0 0
    %486 = vmatpush.bf16.msra.mxu0 %v474
    %487 = vmatpush.bf16.msra.mxu0 %v473
    %488 = vmatmul.bf16.gmra.mxu0 %v478
    %v489 = vpop.f32.mrf.mxu0
    %v490 = vadd.f32 0.0, %v489
    %v491 = vpop.f32.mrf.mxu0
    %v492 = vadd.f32 0.0, %v491
    %493 = vdwg.mxu0
    %vm494 = vcmask 64512
    %v495 = vsel %vm494, %v490, -inf
    %v496 = vrot.slane %v495, 4
    %v497 = vmax.f32 %v495, %v496
    %v498 = vrot.slane %v497, 2
    %v499 = vmax.f32 %v497, %v498
    %v500 = vrot.slane %v499, 1
    %v501 = vmax.f32 %v499, %v500
    %v502 = vsel %vm494, %v492, -inf
    %v503 = vrot.slane %v502, 4
    %v504 = vmax.f32 %v502, %v503
    %v505 = vrot.slane %v504, 2
    %v506 = vmax.f32 %v504, %v505
    %v507 = vrot.slane %v506, 1
    %v508 = vmax.f32 %v506, %v507
    %v509 = vsub.f32 %v490, %v501
    %v510 = vsub.f32 %v492, %v508
    %v511 = vmul.f32 %v509, 1.442695
    %v512 = vpow.pop %v511
    %v513 = vmul.f32 %v510, 1.442695
    %v514 = vpow.pop %v513
    %v515 = vsel %vm494, %v512, 0.0
    %v516 = vrot.slane %v515, 4
    %v517 = vadd.f32 %v515, %v516
    %v518 = vrot.slane %v517, 2
    %v519 = vadd.f32 %v517, %v518
    %v520 = vrot.slane %v519, 1
    %v521 = vadd.f32 %v519, %v520
    %v522 = vsel %vm494, %v514, 0.0
    %v523 = vrot.slane %v522, 4
    %v524 = vadd.f32 %v522, %v523
    %v525 = vrot.slane %v524, 2
    %v526 = vadd.f32 %v524, %v525
    %v527 = vrot.slane %v526, 1
    %v528 = vadd.f32 %v526, %v527
    %v529 = vrcp.pop %v521
    %v530 = vrcp.pop %v528
    %v531 = vmul.f32 %v512, %v529
    %v532 = vmul.f32 %v514, %v530
    %v533 = vpack.c.bf16 %v532, %v531
    %v534 = vld [vmem:[%s15] sm:$0xf]
    %v536 = vsel %vm494, %v533, 0
    %vm538 = vcmask 1043456
    %v540 = vsel %vm538, %v534, 0
    %542 = vmatpush.bf16.msra.mxu0 0
    %543 = vmatpush.bf16.msra.mxu0 0
    %544 = vmatpush.bf16.msra.mxu0 0
    %545 = vmatpush.bf16.msra.mxu0 0
    %546 = vmatpush.bf16.msra.mxu0 0
    %547 = vmatpush.bf16.msra.mxu0 0
    %548 = vmatpush.bf16.msra.mxu0 0
    %549 = vmatpush.bf16.msra.mxu0 %v540
    %550 = vmatmul.bf16.gmra.mxu0 %v536
    %v551 = vpop.f32.mrf.mxu0
    %v552 = vadd.f32 0.0, %v551
    %v553 = vpop.f32.mrf.mxu0
    %v554 = vadd.f32 0.0, %v553
    %555 = vdwg.mxu0
    %558 = vrot.lane.b32.xlu0 %v448, 96
    %v559 = vpop.permute.xlu0 %558
    %560 = vrot.lane.b32.xlu0 %v450, 96
    %v561 = vpop.permute.xlu0 %560
    %v564 = vmul.f32 %v552, %v559
    %v565 = vmul.f32 %v554, %v561
    %v566 = vsel %vm294, %v564, 0.0
    %v567 = vrot.slane %v566, 4
    %v568 = vadd.f32 %v566, %v567
    %v569 = vrot.slane %v568, 2
    %v570 = vadd.f32 %v568, %v569
    %v571 = vrot.slane %v570, 1
    %v572 = vadd.f32 %v570, %v571
    %v573 = vsel %vm294, %v565, 0.0
    %v574 = vrot.slane %v573, 4
    %v575 = vadd.f32 %v573, %v574
    %v576 = vrot.slane %v575, 2
    %v577 = vadd.f32 %v575, %v576
    %v578 = vrot.slane %v577, 1
    %v579 = vadd.f32 %v577, %v578
    %v580 = vpack.c.bf16 %v572, %v572
    %v581 = vpack.c.bf16 %v579, %v579
    %v582 = vld [vmem:[%s12] sm:$0xf]
    %v583 = vld [vmem:[%s12 + $0x4] sm:$0xf]
    %v584 = vld [vmem:[%s12 + $0x8] sm:$0xf]
    %v585 = vld [vmem:[%s12 + $0xc] sm:$0xf]
    %v586 = vld [vmem:[#allocation8] sm:$0x1]
    %v588 = vperm.slane %v586, 0
    %v592 = vunpack.c.l.b16 %v580
    %v593 = vunpack.c.l.b16 %v581
    %vm594 = vcmask 1041409
    %v595 = vsel %vm594, %v593, %v592
    %v596 = vpack.c.b16 %v595, %v595
    %v601 = vunpack.c.l.b16 %v582
    %v602 = vunpack.c.l.b16 %v583
    %v603 = vunpack.c.l.b16 %v584
    %v604 = vunpack.c.l.b16 %v585
    %v605 = vpack.c.b16 %v602, %v601
    %v606 = vpack.c.b16 %v604, %v603
    %v610 = vsel %vm294, %v596, 0
    %612 = vmatpush.bf16.msra.mxu0 0
    %613 = vmatpush.bf16.msra.mxu0 0
    %614 = vmatpush.bf16.msra.mxu0 0
    %615 = vmatpush.bf16.msra.mxu0 0
    %616 = vmatpush.bf16.msra.mxu0 0
    %617 = vmatpush.bf16.msra.mxu0 0
    %618 = vmatpush.bf16.msra.mxu0 %v606
    %619 = vmatpush.bf16.msra.mxu0 %v605
    %620 = vmatmul.bf16.gmra.mxu0 %v610
    %v621 = vpop.f32.mrf.mxu0
    %v622 = vadd.f32 %v588, %v621
    %v623 = vpop.f32.mrf.mxu0
    %624 = vdwg.mxu0
    %v625 = vpack.c.bf16 %v622, %v622
    %v626 = vld [vmem:[%s16] sm:$0xf]
    %v627 = vld [vmem:[%s16 + $0x4] sm:$0xf]
    %v628 = vld [vmem:[%s16 + $0x8] sm:$0xf]
    %v629 = vld [vmem:[%s16 + $0xc] sm:$0xf]
    %v630 = vld [vmem:[%s17] sm:$0xf]
    %v631 = vld [vmem:[%s17 + $0x4] sm:$0xf]
    %v632 = vld [vmem:[%s17 + $0x8] sm:$0xf]
    %v633 = vld [vmem:[%s17 + $0xc] sm:$0xf]
    %v635 = vrot.slane %v378, 1
    %v640 = vunpack.c.l.b16 %v630
    %v641 = vunpack.c.l.b16 %v631
    %v642 = vunpack.c.l.b16 %v632
    %v643 = vunpack.c.l.b16 %v633
    %v644 = vpack.c.b16 %v641, %v640
    %v645 = vpack.c.b16 %v643, %v642
    %v649 = vsel %vm294, %v635, 0
    %651 = vmatpush.bf16.msra.mxu0 0
    %652 = vmatpush.bf16.msra.mxu0 0
    %653 = vmatpush.bf16.msra.mxu0 0
    %654 = vmatpush.bf16.msra.mxu0 0
    %655 = vmatpush.bf16.msra.mxu0 0
    %656 = vmatpush.bf16.msra.mxu0 0
    %657 = vmatpush.bf16.msra.mxu0 %v645
    %658 = vmatpush.bf16.msra.mxu0 %v644
    %659 = vmatmul.bf16.gmra.mxu0 %v649
    %v660 = vpop.f32.mrf.mxu0
    %v661 = vadd.f32 0.0, %v660
    %v662 = vpop.f32.mrf.mxu0
    %663 = vdwg.mxu0
    %v668 = vunpack.c.l.b16 %v626
    %v669 = vunpack.c.l.b16 %v627
    %v670 = vunpack.c.l.b16 %v628
    %v671 = vunpack.c.l.b16 %v629
    %v672 = vpack.c.b16 %v669, %v668
    %v673 = vpack.c.b16 %v671, %v670
    %v677 = vsel %vm294, %v625, 0
    %679 = vmatpush.bf16.msra.mxu0 0
    %680 = vmatpush.bf16.msra.mxu0 0
    %681 = vmatpush.bf16.msra.mxu0 0
    %682 = vmatpush.bf16.msra.mxu0 0
    %683 = vmatpush.bf16.msra.mxu0 0
    %684 = vmatpush.bf16.msra.mxu0 0
    %685 = vmatpush.bf16.msra.mxu0 %v673
    %686 = vmatpush.bf16.msra.mxu0 %v672
    %687 = vmatmul.bf16.gmra.mxu0 %v677
    %v688 = vpop.f32.mrf.mxu0
    %v689 = vadd.f32 %v661, %v688
    %v690 = vpop.f32.mrf.mxu0
    %691 = vdwg.mxu0
    %v692 = vld [vmem:[#allocation10] sm:$0x1]
    %v694 = vperm.slane %v692, 0
    %v696 = vadd.f32 %v689, %v694
    %v697 = vld [vmem:[%s19] sm:$0x1]
    %v698 = vld [vmem:[%s20] sm:$0x1]
    %vm699 = vcmask 254976
    %v700 = vsel %vm699, %v696, 0.0
    %701 = vadd.xlane.f32.xlu0 %v700
    %v702 = vpop.xlane.xlu0 %701
    %v703 = vmul.f32 %v702, %v326
    %v704 = vsub.f32 %v696, %v703
    %v705 = vmul.f32 %v704, %v704
    %v706 = vsel %vm699, %v705, 0.0
    %707 = vadd.xlane.f32.xlu0 %v706
    %v708 = vpop.xlane.xlu0 %707
    %v709 = vmul.f32 %v708, %v326
    %v710 = vadd.f32 %v709, 1e-05
    %v711 = vrsqrt.pop %v710
    %v712 = vmul.f32 %v711, %v710
    %v713 = vmul.f32 %v712, %v711
    %v714 = vmul.f32 0.5, %v713
    %v715 = vsub.f32 1.5, %v714
    %v716 = vmul.f32 %v711, %v715
    %vm717 = vweird.f32 %v710
    %vm718 = vweird.f32 %v711
    %vm719 = vmor %vm717, %vm718
    %v720 = vsel %vm719, %v711, %v716
    %v721 = vmul.f32 %v704, %v720
    %v723 = vperm.slane %v697, 0
    %v725 = vmul.f32 %v721, %v723
    %v727 = vperm.slane %v698, 0
    %v729 = vadd.f32 %v725, %v727
    %v730 = vmax.f32 %v729, 0.0
    %v731 = vld [vmem:[#allocation11] sm:$0x1]
    %v732 = vld [vmem:[#allocation13] sm:$0x1]
    %734 = vrot.lane.b32.xlu0 %v696, 96
    %v735 = vpop.permute.xlu0 %734
    %v737 = vsel %vm699, %v735, 0.0
    %738 = vadd.xlane.f32.xlu0 %v737
    %v739 = vpop.xlane.xlu0 %738
    %v740 = vmul.f32 %v739, %v326
    %v741 = vsub.f32 %v696, %v740
    %v742 = vmul.f32 %v741, %v741
    %744 = vrot.lane.b32.xlu0 %v742, 96
    %v745 = vpop.permute.xlu0 %744
    %v747 = vsel %vm699, %v745, 0.0
    %748 = vadd.xlane.f32.xlu0 %v747
    %v749 = vpop.xlane.xlu0 %748
    %v750 = vmul.f32 %v749, %v326
    %v751 = vadd.f32 %v750, 1e-05
    %v752 = vrsqrt.pop %v751
    %v753 = vmul.f32 %v752, %v751
    %v754 = vmul.f32 %v753, %v752
    %v755 = vmul.f32 0.5, %v754
    %v756 = vsub.f32 1.5, %v755
    %v757 = vmul.f32 %v752, %v756
    %vm758 = vweird.f32 %v751
    %vm759 = vweird.f32 %v752
    %vm760 = vmor %vm758, %vm759
    %v761 = vsel %vm760, %v752, %v757
    %v762 = vmul.f32 %v741, %v761
    %v764 = vperm.slane %v731, 0
    %765 = vrot.lane.b32.xlu0 %v764, 32
    %v766 = vpop.permute.xlu0 %765
    %v768 = vmul.f32 %v762, %v766
    %v770 = vperm.slane %v732, 0
    %771 = vrot.lane.b32.xlu0 %v770, 32
    %v772 = vpop.permute.xlu0 %771
    %v774 = vadd.f32 %v768, %v772
    %v775 = vmax.f32 %v774, 0.0
    %v776 = vpack.c.bf16 %v730, %v730
    %v777 = vld [vmem:[%s23] sm:$0xf]
    %v778 = vld [vmem:[%s23 + $0x4] sm:$0xf]
    %v779 = vld [vmem:[%s23 + $0x8] sm:$0xf]
    %v780 = vld [vmem:[%s23 + $0xc] sm:$0xf]
    %v781 = vld [vmem:[#allocation14] sm:$0x1]
    %v783 = vperm.slane %v781, 0
    %v789 = vunpack.c.l.b16 %v777
    %v790 = vunpack.c.l.b16 %v778
    %v791 = vunpack.c.l.b16 %v779
    %v792 = vunpack.c.l.b16 %v780
    %v793 = vpack.c.b16 %v790, %v789
    %v794 = vpack.c.b16 %v792, %v791
    %v798 = vsel %vm294, %v776, 0
    %800 = vmatpush.bf16.msra.mxu0 0
    %801 = vmatpush.bf16.msra.mxu0 0
    %802 = vmatpush.bf16.msra.mxu0 0
    %803 = vmatpush.bf16.msra.mxu0 0
    %804 = vmatpush.bf16.msra.mxu0 0
    %805 = vmatpush.bf16.msra.mxu0 0
    %806 = vmatpush.bf16.msra.mxu0 %v794
    %807 = vmatpush.bf16.msra.mxu0 %v793
    %808 = vmatmul.bf16.gmra.mxu0 %v798
    %v809 = vpop.f32.mrf.mxu0
    %v810 = vadd.f32 %v783, %v809
    %v811 = vpop.f32.mrf.mxu0
    %812 = vdwg.mxu0
    %813 = vst [vmem:[#allocation17] sm:$0x3] %v810
    %v814 = vpack.c.bf16 %v775, %v775
    %v815 = vld [vmem:[%s25] sm:$0xf]
    %v816 = vld [vmem:[%s25 + $0x4] sm:$0xf]
    %v817 = vld [vmem:[%s25 + $0x8] sm:$0xf]
    %v818 = vld [vmem:[%s25 + $0xc] sm:$0xf]
    %v819 = vld [vmem:[#allocation16] sm:$0x1]
    %v821 = vperm.slane %v819, 0
    %824 = vrot.lane.b32.xlu0 %v814, 96
    %v825 = vpop.permute.xlu0 %824
    %v830 = vunpack.c.l.b16 %v815
    %v831 = vunpack.c.l.b16 %v816
    %v832 = vunpack.c.l.b16 %v817
    %v833 = vunpack.c.l.b16 %v818
    %v834 = vpack.c.b16 %v831, %v830
    %v835 = vpack.c.b16 %v833, %v832
    %v839 = vsel %vm294, %v825, 0
    %841 = vmatpush.bf16.msra.mxu0 0
    %842 = vmatpush.bf16.msra.mxu0 0
    %843 = vmatpush.bf16.msra.mxu0 0
    %844 = vmatpush.bf16.msra.mxu0 0
    %845 = vmatpush.bf16.msra.mxu0 0
    %846 = vmatpush.bf16.msra.mxu0 0
    %847 = vmatpush.bf16.msra.mxu0 %v835
    %848 = vmatpush.bf16.msra.mxu0 %v834
    %849 = vmatmul.bf16.gmra.mxu0 %v839
    %v850 = vpop.f32.mrf.mxu0
    %v851 = vadd.f32 %v821, %v850
    %v852 = vpop.f32.mrf.mxu0
    %853 = vdwg.mxu0
    %854 = vst [vmem:[#allocation18] sm:$0x3] %v851
    // Predicated region
    $region146: #{vis_query_forward.1} parent=1 // pred_check
      _
    $region147: #{vis_query_forward.1} parent=1 // pred_check_branch
      %856 = sbr.rel (0) target = $region149
    $region148: #{vis_query_forward.1} parent=1 // pred_region
      %858 = vsyncadd [#allocation4], 0
      %s860 = sshll.u32 [#allocation17], 4
      %s861 = int_to_ptr.vmem [resolvable:$true] %s860
      %s862 = sshll.u32 %s27, 4
      %s863 = int_to_ptr.hbm [resolvable:$true] %s862
      %865 = dma.vmem_to_hbm [thread:$0]  %s861, 32, %s863, [#allocation4]
    $region149: #{vis_query_forward.1} parent=1 // pred_fallthru
      _
    // Predicated region
    $region150: #{vis_query_forward.1} parent=1 // pred_check
      _
    $region151: #{vis_query_forward.1} parent=1 // pred_check_branch
      %867 = sbr.rel (0) target = $region153
    $region152: #{vis_query_forward.1} parent=1 // pred_region
      %869 = vsyncadd [#allocation19], 0
      %s871 = sshll.u32 [#allocation18], 4
      %s872 = int_to_ptr.vmem [resolvable:$true] %s871
      %s873 = sshll.u32 %s28, 4
      %s874 = int_to_ptr.hbm [resolvable:$true] %s873
      %876 = dma.vmem_to_hbm [thread:$0]  %s872, 32, %s874, [#allocation19]
    $region153: #{vis_query_forward.1} parent=1 // pred_fallthru
      _
    // Predicated region
    $region154: #{vis_query_forward.1} parent=1 // pred_check
      _
    $region155: #{vis_query_forward.1} parent=1 // pred_check_branch
      %878 = sbr.rel (0) target = $region157
    $region156: #{vis_query_forward.1} parent=1 // pred_region
      %880 = dma.done [#allocation4], 32
    $region157: #{vis_query_forward.1} parent=1 // pred_fallthru
      _
    // Predicated region
    $region158: #{vis_query_forward.1} parent=1 // pred_check
      _
    $region159: #{vis_query_forward.1} parent=1 // pred_check_branch
      %882 = sbr.rel (0) target = $region161
    $region160: #{vis_query_forward.1} parent=1 // pred_region
      %884 = dma.done [#allocation19], 32
    $region161: #{vis_query_forward.1} parent=1 // pred_fallthru
      _
    %885 = vsyncpa [#allocation3], 1
    %886 = vsyncpa [#allocation6], 1
    %887 = vsyncpa [#allocation9], 1
    %888 = vsyncpa [#allocation12], 1
    %889 = vsyncpa [#allocation15], 1
    %890 = vsyncpa [#allocation4], 1
    %891 = vsyncpa [#allocation19], 1

</llo_original>
